<compile_context>
chip_gen: v7x
topology: tpu7x:2x2x1
jax: 0.10.0
libtpu: 0.0.40
codegen_flags: <defaults>
</compile_context>

<pallas_src>
import jax
import jax.numpy as jnp
from jax.experimental import pallas as pl
from jax.experimental.pallas import tpu as pltpu

# ---- ConvTranspose1d hyper-parameters (typical MelGAN-style upsample layer) ----
C_IN = 4        # in_channels
C_OUT = 8       # out_channels
K = 4           # kernel_size
STRIDE = 2
PAD = 1
N = 2           # batch
L = 16          # input length
L_OUT = (L - 1) * STRIDE - 2 * PAD + K          # 32

assert K % STRIDE == 0, "polyphase path assumes kernel_size % stride == 0"
assert L_OUT % STRIDE == 0, "polyphase path assumes equal-length output phases"

KP = K // STRIDE              # kernel taps per output phase (2)
LH = L_OUT // STRIDE          # output samples per phase, per batch element (16)
QC = KP * C_IN                # contraction depth of one phase (8)
LANES = 128                   # lane-dense output width (unmasked vst)


def _polyphase_plan(k, stride, pad):
    """Static per-phase plan: flipped tap indices, per-phase read offsets, left pad."""
    reach, taps = [], []
    for p in range(stride):
        r = (p + pad) % stride
        c = (p + pad) // stride
        ks = list(range(r, k, stride))      # kernel taps contributing to output phase p
        taps.append(list(reversed(ks)))     # correlation (flipped) order
        reach.append(len(ks) - 1 - c)       # how far left of x[m] this phase reads
    pad_l = max(max(reach), 0)
    offs = [pad_l - a for a in reach]
    return taps, offs, pad_l


PHASE_TAPS, OFFS, PAD_L = _polyphase_plan(K, STRIDE, PAD)
PAD_R = max(max(OFFS[p] + LH - 1 + KP - 1 for p in range(STRIDE)) - (L + PAD_L - 1), 0)
L_PP = L + PAD_L + PAD_R      # 18 for this config (vs 35 with zero-stuffing)


def convtranspose1d_kernel(x_ref, w_ref, b_ref, o_ref):
    """x_ref: (N, C_IN, L)                  raw input (edge pad done in registers)
       w_ref: (STRIDE*C_OUT, STRIDE*QC)     block-diagonal fused phase weights
       b_ref: (STRIDE*C_OUT, 1)             bias replicated per phase
       o_ref: (STRIDE*C_OUT, LANES)         lane-dense 128-wide output slab
    """
    # In-register edge padding per batch element — no wrapper-side jnp.pad / extra
    # HBM round trip of the activation.
    xp = []
    for n in range(N):
        pieces = []
        if PAD_L:
            pieces.append(jnp.zeros((C_IN, PAD_L), jnp.float32))
        pieces.append(x_ref[n])
        if PAD_R:
            pieces.append(jnp.zeros((C_IN, PAD_R), jnp.float32))
        xp.append(jnp.concatenate(pieces, axis=-1) if len(pieces) > 1 else pieces[0])

    # Stacked im2col operand built purely in registers (static slices + concats):
    # rows = (phase, tap, c_in), cols = (batch, out-sample-within-phase).
    row_blocks = []
    for p in range(STRIDE):
        for j in range(KP):
            row_blocks.append(jnp.concatenate(
                [xp[n][:, OFFS[p] + j: OFFS[p] + j + LH] for n in range(N)],
                axis=-1))                                  # (C_IN, N*LH)
    x_im2col = jnp.concatenate(row_blocks, axis=0)         # (STRIDE*QC, N*LH)

    # Lane-pad the operand to a full 128-wide tile so the single output store is a
    # full-tile, unmasked vst (the MXU pays for the full tile regardless).
    x_im2col = jnp.concatenate(
        [x_im2col, jnp.zeros((STRIDE * QC, LANES - N * LH), jnp.float32)], axis=-1)

    # One fused MXU matmul covering every phase; bias folded into the single store.
    y = jnp.dot(w_ref[...], x_im2col, preferred_element_type=jnp.float32)
    o_ref[...] = y + b_ref[...]


def wn_conv_transpose1d(x, v, g, b):
    """Weight-normalized ConvTranspose1d forward (PyTorch semantics)."""
    # --- weight_norm (dim=0 default): per-in_channel norm over (out_ch, k) (glue) ---
    norm = jnp.sqrt(jnp.sum(v * v, axis=(1, 2), keepdims=True))
    w = g[:, None, None] * v / norm                      # (C_IN, C_OUT, K)

    # --- per-phase flipped-tap packing + block-diagonal fusion (tiny, trace-time glue)
    w_phases = [
        jnp.concatenate([w[:, :, k].T for k in PHASE_TAPS[p]], axis=1)   # (C_OUT, QC)
        for p in range(STRIDE)
    ]
    w_fused = jnp.zeros((STRIDE * C_OUT, STRIDE * QC), jnp.float32)
    for p in range(STRIDE):
        w_fused = w_fused.at[p * C_OUT:(p + 1) * C_OUT,
                             p * QC:(p + 1) * QC].set(w_phases[p])
    b_fused = jnp.tile(b, STRIDE).reshape(STRIDE * C_OUT, 1).astype(jnp.float32)

    # TODO(synk): at production sizes — cast x/w_fused to bfloat16 (keep f32 accumulation
    # and f32 bias; keep all elementwise work f32 on v5e), grid over L_OUT in 128/256-lane
    # multiples marked "parallel" (so v7x shards across its 2 TensorCores), revert to
    # per-phase matmuls once STRIDE*C_OUT nears the MXU tile, size the double-buffered
    # L-tile for ~24 MiB on v7x (64 MiB physical VMEM) vs larger on v5e/v6e, and keep the
    # output phase-major so the consumer reads it directly instead of the transpose below.
    out_flat = pl.pallas_call(
        convtranspose1d_kernel,
        out_shape=jax.ShapeDtypeStruct((STRIDE * C_OUT, LANES), jnp.float32),
        in_specs=[
            pl.BlockSpec(memory_space=pltpu.MemorySpace.VMEM),   # x (whole array)
            pl.BlockSpec(memory_space=pltpu.MemorySpace.VMEM),   # fused weight
            pl.BlockSpec(memory_space=pltpu.MemorySpace.VMEM),   # bias
        ],
        out_specs=pl.BlockSpec(memory_space=pltpu.MemorySpace.VMEM),
        cost_estimate=pl.CostEstimate(
            flops=2 * (STRIDE * C_OUT) * (STRIDE * QC) * LANES,
            transcendentals=0,
            bytes_accessed=4 * (N * C_IN * L + (STRIDE * C_OUT) * (STRIDE * QC)
                                + STRIDE * C_OUT + STRIDE * C_OUT * LANES),
        ),
    )(x.astype(jnp.float32), w_fused, b_fused)

    # --- drop lane padding, interleave phases, un-fold batch (cheap glue at toy size) ---
    # out_flat[p*C_OUT + co, n*LH + s] == y[n, co, STRIDE*s + p]
    out = (out_flat[:, :N * LH]
           .reshape(STRIDE, C_OUT, N, LH)
           .transpose(2, 1, 3, 0)
           .reshape(N, C_OUT, L_OUT))
    return out, w


def reference(x, w, b):
    """Pure-JAX reference matching torch.nn.ConvTranspose1d."""
    # ConvTranspose1d == lhs-dilated correlation with the flipped, transposed kernel.
    w_t = jnp.transpose(w[:, :, ::-1], (1, 0, 2))        # (C_out, C_in, K)
    y = jax.lax.conv_general_dilated(
        x, w_t,
        window_strides=(1,),
        padding=[(K - 1 - PAD, K - 1 - PAD)],
        lhs_dilation=(STRIDE,),
        dimension_numbers=("NCH", "OIH", "NCH"),
    )
    return y + b[None, :, None]


if __name__ == "__main__":
    key = jax.random.PRNGKey(0)
    kx, kv, kg, kb = jax.random.split(key, 4)
    x = jax.random.normal(kx, (N, C_IN, L), jnp.float32)
    # ConvTranspose1d weight shape: (in_channels, out_channels, kernel_size)
    v = jax.random.normal(kv, (C_IN, C_OUT, K), jnp.float32) * 0.3
    g = jax.random.normal(kg, (C_IN,), jnp.float32) + 1.5     # weight_norm gain
    b = jax.random.normal(kb, (C_OUT,), jnp.float32) * 0.1

    y, w = wn_conv_transpose1d(x, v, g, b)
    y = jax.block_until_ready(y)

    y_ref = reference(x, w, b)
    assert y.shape == (N, C_OUT, L_OUT)
    assert jnp.allclose(y, y_ref, atol=1e-5, rtol=1e-5), "mismatch vs reference"
    print("KERNEL_OK")
</pallas_src>

<mosaic_0001>
module attributes {stable_mosaic.version = 11 : i64} {
  func.func @convtranspose1d_kernel(%arg0: memref<2x4x16xf32, #tpu.memory_space<vmem>>, %arg1: memref<16x16xf32, #tpu.memory_space<vmem>>, %arg2: memref<16x1xf32, #tpu.memory_space<vmem>>, %arg3: memref<16x128xf32, #tpu.memory_space<vmem>>) attributes {dimension_semantics = [], scalar_prefetch = 0 : i64, scratch_operands = 0 : i64, tpu.core_type = #tpu.core_type<tc>} {
    %cst = arith.constant 0.000000e+00 : f32
    %0 = vector.broadcast %cst : f32 to vector<4x1xf32>
    %c0 = arith.constant 0 : index
    %c0_0 = arith.constant 0 : index
    %c0_1 = arith.constant 0 : index
    %1 = vector.load %arg0[%c0, %c0_0, %c0_1] : memref<2x4x16xf32, #tpu.memory_space<vmem>>, vector<1x4x16xf32>
    %2 = vector.shape_cast %1 : vector<1x4x16xf32> to vector<4x16xf32>
    %cst_2 = arith.constant 0.000000e+00 : f32
    %3 = vector.broadcast %cst_2 : f32 to vector<4x1xf32>
    %4 = tpu.concatenate %0, %2, %3 in 1 : vector<4x1xf32>, vector<4x16xf32>, vector<4x1xf32> -> vector<4x18xf32>
    %cst_3 = arith.constant 0.000000e+00 : f32
    %5 = vector.broadcast %cst_3 : f32 to vector<4x1xf32>
    %c1 = arith.constant 1 : index
    %c0_4 = arith.constant 0 : index
    %c0_5 = arith.constant 0 : index
    %6 = vector.load %arg0[%c1, %c0_4, %c0_5] : memref<2x4x16xf32, #tpu.memory_space<vmem>>, vector<1x4x16xf32>
    %7 = vector.shape_cast %6 : vector<1x4x16xf32> to vector<4x16xf32>
    %cst_6 = arith.constant 0.000000e+00 : f32
    %8 = vector.broadcast %cst_6 : f32 to vector<4x1xf32>
    %9 = tpu.concatenate %5, %7, %8 in 1 : vector<4x1xf32>, vector<4x16xf32>, vector<4x1xf32> -> vector<4x18xf32>
    %10 = vector.extract_strided_slice %4 {offsets = [0, 0], sizes = [4, 16], strides = [1, 1]} : vector<4x18xf32> to vector<4x16xf32>
    %11 = vector.extract_strided_slice %9 {offsets = [0, 0], sizes = [4, 16], strides = [1, 1]} : vector<4x18xf32> to vector<4x16xf32>
    %12 = tpu.concatenate %10, %11 in 1 : vector<4x16xf32>, vector<4x16xf32> -> vector<4x32xf32>
    %13 = vector.extract_strided_slice %4 {offsets = [0, 1], sizes = [4, 16], strides = [1, 1]} : vector<4x18xf32> to vector<4x16xf32>
    %14 = vector.extract_strided_slice %9 {offsets = [0, 1], sizes = [4, 16], strides = [1, 1]} : vector<4x18xf32> to vector<4x16xf32>
    %15 = tpu.concatenate %13, %14 in 1 : vector<4x16xf32>, vector<4x16xf32> -> vector<4x32xf32>
    %16 = vector.extract_strided_slice %4 {offsets = [0, 1], sizes = [4, 16], strides = [1, 1]} : vector<4x18xf32> to vector<4x16xf32>
    %17 = vector.extract_strided_slice %9 {offsets = [0, 1], sizes = [4, 16], strides = [1, 1]} : vector<4x18xf32> to vector<4x16xf32>
    %18 = tpu.concatenate %16, %17 in 1 : vector<4x16xf32>, vector<4x16xf32> -> vector<4x32xf32>
    %19 = vector.extract_strided_slice %4 {offsets = [0, 2], sizes = [4, 16], strides = [1, 1]} : vector<4x18xf32> to vector<4x16xf32>
    %20 = vector.extract_strided_slice %9 {offsets = [0, 2], sizes = [4, 16], strides = [1, 1]} : vector<4x18xf32> to vector<4x16xf32>
    %21 = tpu.concatenate %19, %20 in 1 : vector<4x16xf32>, vector<4x16xf32> -> vector<4x32xf32>
    %22 = tpu.concatenate %12, %15, %18, %21 in 0 : vector<4x32xf32>, vector<4x32xf32>, vector<4x32xf32>, vector<4x32xf32> -> vector<16x32xf32>
    %cst_7 = arith.constant 0.000000e+00 : f32
    %23 = vector.broadcast %cst_7 : f32 to vector<16x96xf32>
    %24 = tpu.concatenate %22, %23 in 1 : vector<16x32xf32>, vector<16x96xf32> -> vector<16x128xf32>
    %c0_8 = arith.constant 0 : index
    %c0_9 = arith.constant 0 : index
    %25 = vector.load %arg1[%c0_8, %c0_9] : memref<16x16xf32, #tpu.memory_space<vmem>>, vector<16x16xf32>
    %cst_10 = arith.constant dense<0.000000e+00> : vector<16x128xf32>
    %26 = tpu.matmul %25, %24, %cst_10 {dimension_numbers = #tpu.dot_dimension_numbers<[1], [0], [0], [1], [0, 0, 1, 1], [], []>} : vector<16x16xf32>, vector<16x128xf32>, vector<16x128xf32> -> vector<16x128xf32>
    %c0_11 = arith.constant 0 : index
    %c0_12 = arith.constant 0 : index
    %27 = vector.load %arg2[%c0_11, %c0_12] : memref<16x1xf32, #tpu.memory_space<vmem>>, vector<16x1xf32>
    %28 = vector.broadcast %27 : vector<16x1xf32> to vector<16x128xf32>
    %29 = arith.addf %26, %28 : vector<16x128xf32>
    %c0_13 = arith.constant 0 : index
    %c0_14 = arith.constant 0 : index
    %30 = vector.load %arg3[%c0_13, %c0_14] : memref<16x128xf32, #tpu.memory_space<vmem>>, vector<16x128xf32>
    tpu.vector_store %arg3[%c0_13, %c0_14], %29 {strides = array<i32>} : memref<16x128xf32, #tpu.memory_space<vmem>>, vector<16x128xf32>,
    return
  }
}

</mosaic_0001>

<llo_original>
// kernel: tpu_custom_call.1
$region0: #{tpu_custom_call.1}
  #allocation0 [shape = 'u32[]', space=smem, size = 0x4, offset = 0x4, fixed_abs, tag = 'smem constant byte address 0x4 - core index']
  #allocation1 [shape = 'u32[144,128]{1,0:T(1,128)}', space=vmem, size = 0x12000, scoped, tag = 'internal scratch']
  %s0 = inlined_call_operand.hbm [shape: f32[2,4,16], index: 0, kind: input, shape index: {}]
  %s1 = inlined_call_operand.vmem [shape: f32[16,16], index: 1, kind: input, shape index: {}]
  %s2 = inlined_call_operand.vmem [shape: f32[16,1], index: 2, kind: input, shape index: {}]
  %s3 = inlined_call_operand.hbm [shape: f32[16,128], index: 3, kind: output, shape index: {}]
  %s4 = sld [smem:[#allocation0]]
  $region26: #{tpu_custom_call.1} parent=0
    _
  %s6 = ssub.s32 1, %s4
  %s7 = scalar_select 0, %s6, %s4
  $region1: #{tpu_custom_call.1} parent=0
    #allocation2 [shape = 'u8[4096]{0}', space=vmem, size = 0x1000, scoped, tag = 'input window, operand 0, single buffered']
    #allocation3 [shape = 's32[1]{0}', space=sflag, size = 0x4, scoped, tag = 'scoped memory for tpu_custom_call.1']
    #allocation4 [shape = 's32[1]{0}', space=sflag, size = 0x4, scoped, tag = 'scoped memory for tpu_custom_call.1']
    #allocation5 [shape = 'u8[8192]{0}', space=vmem, size = 0x2000, scoped, tag = 'output window, operand 0, single buffered']
    %8 = vsyncpa [#allocation3], 0
    %9 = vsyncpa [#allocation4], 0
    // Predicated region
    $region2: #{tpu_custom_call.1} parent=1 // pred_check
      _
    $region3: #{tpu_custom_call.1} parent=1 // pred_check_branch
      %11 = sbr.rel (0) target = $region5
    $region4: #{tpu_custom_call.1} parent=1 // pred_region
      %s13 = ssub.s32 128, 128
      %14 = vsyncadd [#allocation3], %s13
      %s15 = sshll.u32 [#allocation2], 4
      %s16 = int_to_ptr.vmem [resolvable:$true] %s15
      %21 = dma.hbm_to_vmem [thread:$0]  %s0, 128, %s16, [#allocation3], 64, 64, 4
    $region5: #{tpu_custom_call.1} parent=1 // pred_fallthru
      _
    // Predicated region
    $region6: #{tpu_custom_call.1} parent=1 // pred_check
      _
    $region7: #{tpu_custom_call.1} parent=1 // pred_check_branch
      %23 = sbr.rel (0) target = $region9
    $region8: #{tpu_custom_call.1} parent=1 // pred_region
      _
    $region9: #{tpu_custom_call.1} parent=1 // pred_fallthru
      _
    // Predicated region
    $region10: #{tpu_custom_call.1} parent=1 // pred_check
      _
    $region11: #{tpu_custom_call.1} parent=1 // pred_check_branch
      %25 = sbr.rel (0) target = $region13
    $region12: #{tpu_custom_call.1} parent=1 // pred_region
      _
    $region13: #{tpu_custom_call.1} parent=1 // pred_fallthru
      _
    // Predicated region
    $region14: #{tpu_custom_call.1} parent=1 // pred_check
      _
    $region15: #{tpu_custom_call.1} parent=1 // pred_check_branch
      %27 = sbr.rel (0) target = $region17
    $region16: #{tpu_custom_call.1} parent=1 // pred_region
      %28 = dma.done [#allocation3], 128
    $region17: #{tpu_custom_call.1} parent=1 // pred_fallthru
      _
    %v29 = vld [vmem:[#allocation2] sm:$0xf]
    %31 = vrot.lane.b32.xlu0 %v29, 1
    %v32 = vpop.permute.xlu0 %31
    %vm34 = vcmask 7168
    %v35 = vsel %vm34, 0.0, %v32
    %vm36 = vcmask 138240
    %v37 = vsel %vm36, %v35, 0.0
    %s38 = scalar_lea.vmem [#allocation2], 4
    %v39 = vld [vmem:[%s38] sm:$0xf]
    %41 = vrot.lane.b32.xlu0 %v39, 1
    %v42 = vpop.permute.xlu0 %41
    %v44 = vsel %vm34, 0.0, %v42
    %v45 = vsel %vm36, %v44, 0.0
    %47 = vrot.lane.b32.xlu0 %v45, 16
    %v48 = vpop.permute.xlu0 %47
    %vm50 = vcmask 130048
    %v51 = vsel %vm50, %v37, %v48
    %53 = vrot.lane.b32.xlu0 %v37, 127
    %v54 = vpop.permute.xlu0 %53
    %56 = vrot.lane.b32.xlu0 %v45, 15
    %v57 = vpop.permute.xlu0 %56
    %v59 = vsel %vm50, %v54, %v57
    %60 = vrot.lane.b32.xlu0 %v37, 126
    %v61 = vpop.permute.xlu0 %60
    %63 = vrot.lane.b32.xlu0 %v45, 14
    %v64 = vpop.permute.xlu0 %63
    %v66 = vsel %vm50, %v61, %v64
    %v68 = vrot.slane %v59, 4
    %v71 = vrot.slane %v66, 4
    %vm73 = vcmask 1043456
    %v74 = vsel %vm73, %v51, %v68
    %v75 = vsel %vm73, %v59, %v71
    %vm76 = vcmask 261120
    %v77 = vsel %vm76, %v74, 0.0
    %v78 = vsel %vm76, %v75, 0.0
    %v79 = vld [vmem:[%s1] sm:$0xff]
    %v80 = vld [vmem:[%s1 + $0x8] sm:$0xff]
    %v81 = vld [vmem:[%s2] sm:$0xff]
    %v82 = vld [vmem:[%s2 + $0x8] sm:$0xff]
    %84 = vset.pattern.permute.xlu0 0
    %85 = vperm.xlu0 %84, %v81
    %v86 = vpop.permute.xlu0 %85
    %89 = vset.pattern.permute.xlu0 0
    %90 = vperm.xlu0 %89, %v82
    %v91 = vpop.permute.xlu0 %90
    %v94 = vsel %vm50, %v79, 0
    %v97 = vsel %vm50, %v80, 0
    %99 = vmatprep.subr.mxu0 0.0
    %100 = vmatpush1.msra.mxu0 %v77
    %101 = vmatprep.subr.mxu0 0.0
    %102 = vmatpush1.msra.mxu0 %v78
    %103 = vmatprep.subr.mxu0 0.0
    %104 = vmatpush1.msra.mxu0 0.0
    %105 = vmatprep.subr.mxu0 0.0
    %106 = vmatpush1.msra.mxu0 0.0
    %107 = vmatprep.subr.mxu0 0.0
    %108 = vmatpush1.msra.mxu0 0.0
    %109 = vmatprep.subr.mxu0 0.0
    %110 = vmatpush1.msra.mxu0 0.0
    %111 = vmatprep.subr.mxu0 0.0
    %112 = vmatpush1.msra.mxu0 0.0
    %113 = vmatprep.subr.mxu0 0.0
    %114 = vmatpush1.msra.mxu0 0.0
    %115 = vmatprep.subr.mxu0 0.0
    %116 = vmatpush1.msra.mxu0 0.0
    %117 = vmatprep.subr.mxu0 0.0
    %118 = vmatpush1.msra.mxu0 0.0
    %119 = vmatprep.subr.mxu0 0.0
    %120 = vmatpush1.msra.mxu0 0.0
    %121 = vmatprep.subr.mxu0 0.0
    %122 = vmatpush1.msra.mxu0 0.0
    %123 = vmatprep.subr.mxu0 0.0
    %124 = vmatpush1.msra.mxu0 0.0
    %125 = vmatprep.subr.mxu0 0.0
    %126 = vmatpush1.msra.mxu0 0.0
    %127 = vmatprep.subr.mxu0 0.0
    %128 = vmatpush1.msra.mxu0 0.0
    %129 = vmatprep.subr.mxu0 0.0
    %130 = vmatpush1.msra.mxu0 0.0
    %131 = vmatprep.subr.mxu0 0.0
    %132 = vmatpush1.msra.mxu0 0.0
    %133 = vmatprep.subr.mxu0 0.0
    %134 = vmatpush1.msra.mxu0 0.0
    %135 = vmatprep.subr.mxu0 0.0
    %136 = vmatpush1.msra.mxu0 0.0
    %137 = vmatprep.subr.mxu0 0.0
    %138 = vmatpush1.msra.mxu0 0.0
    %139 = vmatprep.subr.mxu0 0.0
    %140 = vmatpush1.msra.mxu0 0.0
    %141 = vmatprep.subr.mxu0 0.0
    %142 = vmatpush1.msra.mxu0 0.0
    %143 = vmatprep.subr.mxu0 0.0
    %144 = vmatpush1.msra.mxu0 0.0
    %145 = vmatprep.subr.mxu0 0.0
    %146 = vmatpush1.msra.mxu0 0.0
    %147 = vmatprep.subr.mxu0 0.0
    %148 = vmatpush1.msra.mxu0 0.0
    %149 = vmatprep.subr.mxu0 0.0
    %150 = vmatpush1.msra.mxu0 0.0
    %151 = vmatprep.subr.mxu0 0.0
    %152 = vmatpush1.msra.mxu0 0.0
    %153 = vmatprep.subr.mxu0 0.0
    %154 = vmatpush1.msra.mxu0 0.0
    %155 = vmatprep.subr.mxu0 0.0
    %156 = vmatpush1.msra.mxu0 0.0
    %157 = vmatprep.subr.mxu0 0.0
    %158 = vmatpush1.msra.mxu0 0.0
    %159 = vmatprep.subr.mxu0 0.0
    %160 = vmatpush1.msra.mxu0 0.0
    %161 = vmatprep.subr.mxu0 0.0
    %162 = vmatpush1.msra.mxu0 0.0
    %163 = vmatprep.mubr.f32.mxu0 0.0
    %164 = vmatmul.mubr.f32.gmra.mrb[0].mxu0 %v94
    %v165 = vpop.f32.mrb[0].mxu0
    %v166 = vadd.f32 %v86, %v165
    %v167 = vpop.f32.mrb[0].mxu0
    %168 = vmatprep.mubr.f32.mxu0 0.0
    %169 = vmatmul.mubr.f32.gmra.mrb[0].mxu0 %v97
    %v170 = vpop.f32.mrb[0].mxu0
    %v171 = vadd.f32 %v91, %v170
    %v172 = vpop.f32.mrb[0].mxu0
    %173 = vdwg.mxu0
    %174 = vst [vmem:[#allocation5] sm:$0xff] %v166
    %175 = vst [vmem:[#allocation5 + $0x8] sm:$0xff] %v171
    // Predicated region
    $region18: #{tpu_custom_call.1} parent=1 // pred_check
      _
    $region19: #{tpu_custom_call.1} parent=1 // pred_check_branch
      %177 = sbr.rel (0) target = $region21
    $region20: #{tpu_custom_call.1} parent=1 // pred_region
      %s179 = ssub.s32 256, 256
      %180 = vsyncadd [#allocation4], %s179
      %s181 = sshll.u32 [#allocation5], 4
      %s182 = int_to_ptr.vmem [resolvable:$true] %s181
      %187 = dma.vmem_to_hbm [thread:$0]  %s182, 256, %s3, [#allocation4], 128, 128, 8
    $region21: #{tpu_custom_call.1} parent=1 // pred_fallthru
      _
    // Predicated region
    $region22: #{tpu_custom_call.1} parent=1 // pred_check
      _
    $region23: #{tpu_custom_call.1} parent=1 // pred_check_branch
      %189 = sbr.rel (0) target = $region25
    $region24: #{tpu_custom_call.1} parent=1 // pred_region
      %190 = dma.done [#allocation4], 256
    $region25: #{tpu_custom_call.1} parent=1 // pred_fallthru
      _
    %191 = vsyncpa [#allocation3], 1
    %192 = vsyncpa [#allocation4], 1

</llo_original>
